<compile_context>
chip_gen: v6e
topology: v6e:2x2x1
jax: 0.10.0
libtpu: 0.0.40
codegen_flags: <defaults>
</compile_context>

<pallas_src>
import functools

import jax
import jax.numpy as jnp
from jax import lax
from jax.experimental import pallas as pl
from jax.experimental.pallas import tpu as pltpu

DROPOUT_P = 0.1
_LANE = 128


def _attn_dropout_kernel(scale_ref, q_ref, k_ref, v_ref, bits_ref, o_ref, *,
                         keep_threshold, inv_keep):
    # q: (Lq, D), k: (Lk, D), v: (Lk, Dv_pad), bits: (Lq, Lk) int32 in [0, 2^31)
    # Fold the scalar scale into the smaller (Lq, D) tile: (s*q)@k^T == s*(q@k^T)
    q = q_ref[...] * scale_ref[0]
    k = k_ref[...]

    # qk = q @ k^T without an explicit transpose: contract last dims directly
    # so the MXU is fed without an XLU vxpose / temporary.
    qk = lax.dot_general(
        q, k,
        dimension_numbers=(((1,), (1,)), ((), ())),
        preferred_element_type=jnp.float32,
    )

    # Numerically-stable softmax along the key axis, with the dropout rescale
    # 1/(1-p) folded into the (Lq, 1) reciprocal column (exact division kept
    # for interpret-mode portability; cost is negligible at (Lq, 1)).
    m = jnp.max(qk, axis=-1, keepdims=True)
    e = jnp.exp(qk - m)
    denom = jnp.sum(e, axis=-1, keepdims=True)
    inv = jnp.float32(inv_keep) / denom
    probs = e * inv

    # Dropout keep-test entirely in integer space: drop iff bits < threshold,
    # P(drop) = threshold / 2^31 = dropout_p.
    keep = bits_ref[...] >= jnp.int32(keep_threshold)
    probs = jnp.where(keep, probs, jnp.float32(0.0))

    # out = probs @ v  -> (Lq, Dv_pad), lane-dense store.
    o_ref[...] = jnp.dot(probs, v_ref[...], preferred_element_type=jnp.float32)


def _dropout_bits(rng_key, lq, lk):
    """31-bit uniform random ints, reproducible from `rng_key`."""
    return (jax.random.bits(rng_key, (lq, lk), jnp.uint32) >> 1).astype(jnp.int32)


def attention_with_dropout(query, key, value, scale_factor, dropout_p, rng_key):
    """query: (1, Lq, D)  key: (1, Lk, D)  value: (1, Lk, Dv) -> (1, Lq, Dv)."""
    assert query.shape[0] == 1 and key.shape[0] == 1 and value.shape[0] == 1
    q2, k2, v2 = query[0], key[0], value[0]
    Lq, D = q2.shape
    Lk, Dv = v2.shape
    assert k2.shape == (Lk, D)

    # Pad the value/output feature dim up to a full 128-lane multiple so the
    # output writeback is unmasked; padded columns contribute exact zeros.
    Dv_pad = ((Dv + _LANE - 1) // _LANE) * _LANE
    if Dv_pad != Dv:
        v2 = jnp.pad(v2, ((0, 0), (0, Dv_pad - Dv)))

    scale = jnp.asarray(scale_factor, jnp.float32).reshape(1)
    bits31 = _dropout_bits(rng_key, Lq, Lk)

    p = float(dropout_p)
    kernel = functools.partial(
        _attn_dropout_kernel,
        keep_threshold=int(round(p * (1 << 31))),
        inv_keep=1.0 / (1.0 - p),
    )

    out2 = pl.pallas_call(
        kernel,
        out_shape=jax.ShapeDtypeStruct((Lq, Dv_pad), jnp.float32),
        in_specs=[
            pl.BlockSpec(memory_space=pltpu.MemorySpace.SMEM),   # scale (scalar)
            pl.BlockSpec(memory_space=pltpu.MemorySpace.VMEM),   # q
            pl.BlockSpec(memory_space=pltpu.MemorySpace.VMEM),   # k
            pl.BlockSpec(memory_space=pltpu.MemorySpace.VMEM),   # v (padded)
            pl.BlockSpec(memory_space=pltpu.MemorySpace.VMEM),   # dropout bits
        ],
        out_specs=pl.BlockSpec(memory_space=pltpu.MemorySpace.VMEM),
    )(scale, q2, k2, v2, bits31)

    return out2[None, :, :Dv]  # restore batch dim, drop lane padding


def _reference(query, key, value, scale_factor, dropout_p, bits31):
    """Pure-JAX reference using the same dropout bits / threshold."""
    qk = jnp.einsum("bqd,bkd->bqk", query, key) * scale_factor
    probs = jax.nn.softmax(qk, axis=-1)
    keep = bits31[None] >= jnp.int32(int(round(float(dropout_p) * (1 << 31))))
    dropped = jnp.where(keep, probs / (1.0 - float(dropout_p)), 0.0)
    return jnp.einsum("bqk,bkv->bqv", dropped, value)


if __name__ == "__main__":
    root = jax.random.PRNGKey(0)
    kq, kk, kv, kdrop = jax.random.split(root, 4)

    Lq, Lk, D, Dv = 16, 32, 16, 100
    query = jax.random.normal(kq, (1, Lq, D), dtype=jnp.float32)
    key = jax.random.normal(kk, (1, Lk, D), dtype=jnp.float32)
    value = jax.random.normal(kv, (1, Lk, Dv), dtype=jnp.float32)
    scale_factor = jnp.float32(0.5)

    out = attention_with_dropout(query, key, value, scale_factor, DROPOUT_P,
                                 rng_key=kdrop)
    jax.block_until_ready(out)
    assert out.shape == (1, Lq, Dv) and out.dtype == jnp.float32

    # Deterministic correctness check against a pure-JAX reference that uses
    # the identical dropout bits (dropout can only match PyTorch distribution-
    # ally, not bit-exactly, so the reference is JAX-side).
    ref = _reference(query, key, value, scale_factor, DROPOUT_P,
                     _dropout_bits(kdrop, Lq, Lk))
    assert jnp.allclose(out, ref, atol=1e-3, rtol=1e-3)

    print("KERNEL_OK")
</pallas_src>

<mosaic_0001>
module attributes {stable_mosaic.version = 11 : i64} {
  func.func @_attn_dropout_kernel(%arg0: memref<1xf32, #tpu.memory_space<smem>>, %arg1: memref<16x16xf32, #tpu.memory_space<vmem>>, %arg2: memref<32x16xf32, #tpu.memory_space<vmem>>, %arg3: memref<32x128xf32, #tpu.memory_space<vmem>>, %arg4: memref<16x32xi32, #tpu.memory_space<vmem>>, %arg5: memref<16x128xf32, #tpu.memory_space<vmem>>) attributes {dimension_semantics = [], scalar_prefetch = 0 : i64, scratch_operands = 0 : i64, tpu.core_type = #tpu.core_type<tc>} {
    %c0 = arith.constant 0 : index
    %c0_0 = arith.constant 0 : index
    %0 = vector.load %arg1[%c0, %c0_0] : memref<16x16xf32, #tpu.memory_space<vmem>>, vector<16x16xf32>
    %c0_1 = arith.constant 0 : index
    %1 = memref.load %arg0[%c0_1] : memref<1xf32, #tpu.memory_space<smem>>
    %2 = vector.broadcast %1 : f32 to vector<16x16xf32>
    %3 = arith.mulf %0, %2 : vector<16x16xf32>
    %c0_2 = arith.constant 0 : index
    %c0_3 = arith.constant 0 : index
    %4 = vector.load %arg2[%c0_2, %c0_3] : memref<32x16xf32, #tpu.memory_space<vmem>>, vector<32x16xf32>
    %cst = arith.constant dense<0.000000e+00> : vector<16x32xf32>
    %5 = tpu.matmul %3, %4, %cst {dimension_numbers = #tpu.dot_dimension_numbers<[1], [1], [0], [0], [0, 0, 1, 0], [], []>} : vector<16x16xf32>, vector<32x16xf32>, vector<16x32xf32> -> vector<16x32xf32>
    %cst_4 = arith.constant dense<0xFF800000> : vector<16xf32>
    %6 = vector.multi_reduction <maximumf>, %5, %cst_4 [1] : vector<16x32xf32> to vector<16xf32>
    %7 = vector.shape_cast %6 : vector<16xf32> to vector<16x1xf32>
    %8 = vector.broadcast %7 : vector<16x1xf32> to vector<16x32xf32>
    %9 = arith.subf %5, %8 : vector<16x32xf32>
    %10 = math.exp %9 : vector<16x32xf32>
    %cst_5 = arith.constant dense<0.000000e+00> : vector<16xf32>
    %11 = vector.multi_reduction <add>, %10, %cst_5 [1] : vector<16x32xf32> to vector<16xf32>
    %12 = vector.shape_cast %11 : vector<16xf32> to vector<16x1xf32>
    %cst_6 = arith.constant 1.11111116 : f32
    %13 = vector.broadcast %cst_6 : f32 to vector<16x1xf32>
    %14 = arith.divf %13, %12 : vector<16x1xf32>
    %15 = vector.broadcast %14 : vector<16x1xf32> to vector<16x32xf32>
    %16 = arith.mulf %10, %15 : vector<16x32xf32>
    %c0_7 = arith.constant 0 : index
    %c0_8 = arith.constant 0 : index
    %17 = vector.load %arg4[%c0_7, %c0_8] : memref<16x32xi32, #tpu.memory_space<vmem>>, vector<16x32xi32>
    %c214748365_i32 = arith.constant 214748365 : i32
    %18 = vector.broadcast %c214748365_i32 : i32 to vector<16x32xi32>
    %19 = arith.cmpi sge, %17, %18 : vector<16x32xi32>
    %cst_9 = arith.constant 0.000000e+00 : f32
    %20 = vector.broadcast %cst_9 : f32 to vector<16x32xf32>
    %21 = arith.select %19, %16, %20 : vector<16x32xi1>, vector<16x32xf32>
    %c0_10 = arith.constant 0 : index
    %c0_11 = arith.constant 0 : index
    %22 = vector.load %arg3[%c0_10, %c0_11] : memref<32x128xf32, #tpu.memory_space<vmem>>, vector<32x128xf32>
    %cst_12 = arith.constant dense<0.000000e+00> : vector<16x128xf32>
    %23 = tpu.matmul %21, %22, %cst_12 {dimension_numbers = #tpu.dot_dimension_numbers<[1], [0], [0], [1], [0, 0, 1, 1], [], []>} : vector<16x32xf32>, vector<32x128xf32>, vector<16x128xf32> -> vector<16x128xf32>
    %c0_13 = arith.constant 0 : index
    %c0_14 = arith.constant 0 : index
    %24 = vector.load %arg5[%c0_13, %c0_14] : memref<16x128xf32, #tpu.memory_space<vmem>>, vector<16x128xf32>
    tpu.vector_store %arg5[%c0_13, %c0_14], %23 {strides = array<i32>} : memref<16x128xf32, #tpu.memory_space<vmem>>, vector<16x128xf32>,
    return
  }
}

</mosaic_0001>

<llo_original>
// kernel: tpu_custom_call.1
$region0: #{tpu_custom_call.1}
  #allocation0 [shape = 'u32[]', space=smem, size = 0x4, offset = 0x4, fixed_abs, tag = 'smem constant byte address 0x4 - core index']
  #allocation1 [shape = 'u32[144,128]{1,0:T(1,128)}', space=vmem, size = 0x12000, scoped, tag = 'internal scratch']
  #allocation2 [shape = 'f32[1]{0:T(128)S(6)}', space=smem, size = 0x200, scoped, tag = 'scoped memory for tpu_custom_call.1']
  %s0 = inlined_call_operand.<no memory space> [shape: f32[1], index: 0, kind: input, shape index: {}]
  %s1 = inlined_call_operand.vmem [shape: f32[16,16], index: 1, kind: input, shape index: {}]
  %s2 = inlined_call_operand.vmem [shape: f32[32,16], index: 2, kind: input, shape index: {}]
  %s3 = inlined_call_operand.vmem [shape: f32[32,128], index: 3, kind: input, shape index: {}]
  %s4 = inlined_call_operand.hbm [shape: s32[16,32], index: 4, kind: input, shape index: {}]
  %s5 = inlined_call_operand.hbm [shape: f32[16,128], index: 5, kind: output, shape index: {}]
  %s6 = sld [smem:[#allocation0]]
  $region34: #{tpu_custom_call.1} parent=0
    _
  %s8 = ssub.s32 1, %s6
  %s9 = scalar_select 0, %s8, %s6
  %10 = sst [smem:[#allocation2]] %s0
  $region1: #{tpu_custom_call.1} parent=0
    #allocation3 [shape = 'u8[8192]{0}', space=vmem, size = 0x2000, scoped, tag = 'input window, operand 4, single buffered']
    #allocation4 [shape = 's32[1]{0}', space=sflag, size = 0x4, scoped, tag = 'scoped memory for tpu_custom_call.1']
    #allocation5 [shape = 's32[1]{0}', space=sflag, size = 0x4, scoped, tag = 'scoped memory for tpu_custom_call.1']
    #allocation6 [shape = 'u8[8192]{0}', space=vmem, size = 0x2000, scoped, tag = 'output window, operand 0, single buffered']
    %11 = vsyncpa [#allocation4], 0
    %12 = vsyncpa [#allocation5], 0
    // Predicated region
    $region2: #{tpu_custom_call.1} parent=1 // pred_check
      _
    $region3: #{tpu_custom_call.1} parent=1 // pred_check_branch
      %14 = sbr.rel (0) target = $region5
    $region4: #{tpu_custom_call.1} parent=1 // pred_region
      _
    $region5: #{tpu_custom_call.1} parent=1 // pred_fallthru
      _
    // Predicated region
    $region6: #{tpu_custom_call.1} parent=1 // pred_check
      _
    $region7: #{tpu_custom_call.1} parent=1 // pred_check_branch
      %16 = sbr.rel (0) target = $region9
    $region8: #{tpu_custom_call.1} parent=1 // pred_region
      _
    $region9: #{tpu_custom_call.1} parent=1 // pred_fallthru
      _
    // Predicated region
    $region10: #{tpu_custom_call.1} parent=1 // pred_check
      _
    $region11: #{tpu_custom_call.1} parent=1 // pred_check_branch
      %18 = sbr.rel (0) target = $region13
    $region12: #{tpu_custom_call.1} parent=1 // pred_region
      _
    $region13: #{tpu_custom_call.1} parent=1 // pred_fallthru
      _
    // Predicated region
    $region14: #{tpu_custom_call.1} parent=1 // pred_check
      _
    $region15: #{tpu_custom_call.1} parent=1 // pred_check_branch
      %20 = sbr.rel (0) target = $region17
    $region16: #{tpu_custom_call.1} parent=1 // pred_region
      _
    $region17: #{tpu_custom_call.1} parent=1 // pred_fallthru
      _
    // Predicated region
    $region18: #{tpu_custom_call.1} parent=1 // pred_check
      _
    $region19: #{tpu_custom_call.1} parent=1 // pred_check_branch
      %22 = sbr.rel (0) target = $region21
    $region20: #{tpu_custom_call.1} parent=1 // pred_region
      %s24 = ssub.s32 256, 256
      %25 = vsyncadd [#allocation4], %s24
      %s26 = sshll.u32 [#allocation3], 4
      %s27 = int_to_ptr.vmem [resolvable:$true] %s26
      %32 = dma.hbm_to_vmem [thread:$0]  %s4, 256, %s27, [#allocation4], 128, 128, 8
    $region21: #{tpu_custom_call.1} parent=1 // pred_fallthru
      _
    // Predicated region
    $region22: #{tpu_custom_call.1} parent=1 // pred_check
      _
    $region23: #{tpu_custom_call.1} parent=1 // pred_check_branch
      %34 = sbr.rel (0) target = $region25
    $region24: #{tpu_custom_call.1} parent=1 // pred_region
      %35 = dma.done [#allocation4], 256
    $region25: #{tpu_custom_call.1} parent=1 // pred_fallthru
      _
    %v36 = vld [vmem:[%s1] sm:$0xff]
    %v37 = vld [vmem:[%s1 + $0x8] sm:$0xff]
    %s38 = sld [smem:[#allocation2]]
    %v39 = vstv %s38
    %v40 = vmul.f32 %v36, %v39
    %v41 = vmul.f32 %v37, %v39
    %v42 = vld [vmem:[%s2] sm:$0xff]
    %v43 = vld [vmem:[%s2 + $0x8] sm:$0xff]
    %v44 = vld [vmem:[%s2 + $0x10] sm:$0xff]
    %v45 = vld [vmem:[%s2 + $0x18] sm:$0xff]
    %vm46 = vcmask 130048
    %v48 = vsel %vm46, %v40, 0
    %v51 = vsel %vm46, %v41, 0
    %v54 = vsel %vm46, %v42, 0
    %v57 = vsel %vm46, %v43, 0
    %v60 = vsel %vm46, %v44, 0
    %v63 = vsel %vm46, %v45, 0
    %65 = vmatprep.subr.mxu0 0.0
    %66 = vmatpush1.xpose.msra.mxu0 0.0
    %67 = vmatprep.subr.mxu0 0.0
    %68 = vmatpush1.xpose.msra.mxu0 0.0
    %69 = vmatprep.subr.mxu0 0.0
    %70 = vmatpush1.xpose.msra.mxu0 0.0
    %71 = vmatprep.subr.mxu0 0.0
    %72 = vmatpush1.xpose.msra.mxu0 0.0
    %73 = vmatprep.subr.mxu0 0.0
    %74 = vmatpush1.xpose.msra.mxu0 0.0
    %75 = vmatprep.subr.mxu0 0.0
    %76 = vmatpush1.xpose.msra.mxu0 0.0
    %77 = vmatprep.subr.mxu0 0.0
    %78 = vmatpush1.xpose.msra.mxu0 0.0
    %79 = vmatprep.subr.mxu0 0.0
    %80 = vmatpush1.xpose.msra.mxu0 0.0
    %81 = vmatprep.subr.mxu0 0.0
    %82 = vmatpush1.xpose.msra.mxu0 0.0
    %83 = vmatprep.subr.mxu0 0.0
    %84 = vmatpush1.xpose.msra.mxu0 0.0
    %85 = vmatprep.subr.mxu0 0.0
    %86 = vmatpush1.xpose.msra.mxu0 0.0
    %87 = vmatprep.subr.mxu0 0.0
    %88 = vmatpush1.xpose.msra.mxu0 0.0
    %89 = vmatprep.subr.mxu0 0.0
    %90 = vmatpush1.xpose.msra.mxu0 %v63
    %91 = vmatprep.subr.mxu0 0.0
    %92 = vmatpush1.xpose.msra.mxu0 %v60
    %93 = vmatprep.subr.mxu0 0.0
    %94 = vmatpush1.xpose.msra.mxu0 %v57
    %95 = vmatprep.subr.mxu0 0.0
    %96 = vmatpush1.xpose.msra.mxu0 %v54
    %97 = vmatprep.subr.mxu0 0.0
    %98 = vmatpush2.xpose.msra.mxu0 0.0
    %99 = vmatprep.subr.mxu0 0.0
    %100 = vmatpush2.xpose.msra.mxu0 0.0
    %101 = vmatprep.subr.mxu0 0.0
    %102 = vmatpush2.xpose.msra.mxu0 0.0
    %103 = vmatprep.subr.mxu0 0.0
    %104 = vmatpush2.xpose.msra.mxu0 0.0
    %105 = vmatprep.subr.mxu0 0.0
    %106 = vmatpush2.xpose.msra.mxu0 0.0
    %107 = vmatprep.subr.mxu0 0.0
    %108 = vmatpush2.xpose.msra.mxu0 0.0
    %109 = vmatprep.subr.mxu0 0.0
    %110 = vmatpush2.xpose.msra.mxu0 0.0
    %111 = vmatprep.subr.mxu0 0.0
    %112 = vmatpush2.xpose.msra.mxu0 0.0
    %113 = vmatprep.subr.mxu0 0.0
    %114 = vmatpush2.xpose.msra.mxu0 0.0
    %115 = vmatprep.subr.mxu0 0.0
    %116 = vmatpush2.xpose.msra.mxu0 0.0
    %117 = vmatprep.subr.mxu0 0.0
    %118 = vmatpush2.xpose.msra.mxu0 0.0
    %119 = vmatprep.subr.mxu0 0.0
    %120 = vmatpush2.xpose.msra.mxu0 0.0
    %121 = vmatprep.subr.mxu0 0.0
    %122 = vmatpush2.xpose.msra.mxu0 0.0
    %123 = vmatprep.subr.mxu0 0.0
    %124 = vmatpush2.xpose.msra.mxu0 0.0
    %125 = vmatprep.subr.mxu0 0.0
    %126 = vmatpush2.xpose.msra.mxu0 0.0
    %127 = vmatprep.subr.mxu0 0.0
    %128 = vmatpush2.xpose.msra.mxu0 0.0
    %129 = vmatprep.mubr.f32.mxu0 0.0
    %130 = vmatmul.mubr.f32.gmra.mxu0 %v48
    %v131 = vpop.f32.mrf.mxu0
    %v132 = vadd.f32 0.0, %v131
    %v133 = vpop.f32.mrf.mxu0
    %134 = vmatprep.mubr.f32.mxu0 0.0
    %135 = vmatmul.mubr.f32.gmra.mxu0 %v51
    %v136 = vpop.f32.mrf.mxu0
    %v137 = vadd.f32 0.0, %v136
    %v138 = vpop.f32.mrf.mxu0
    %139 = vdwg.mxu0
    %vm140 = vcmask 261120
    %v141 = vsel %vm140, %v132, -inf
    %142 = vmax.xlane.f32.xlu0 %v141
    %v143 = vpop.xlane.xlu0 %142
    %v144 = vsel %vm140, %v137, -inf
    %145 = vmax.xlane.f32.xlu0 %v144
    %v146 = vpop.xlane.xlu0 %145
    %v147 = vsub.f32 %v132, %v143
    %v148 = vsub.f32 %v137, %v146
    %v149 = vmul.f32 %v147, 1.442695
    %v150 = vpow.pop %v149
    %v151 = vmul.f32 %v148, 1.442695
    %v152 = vpow.pop %v151
    %v153 = vsel %vm140, %v150, 0.0
    %154 = vadd.xlane.f32.xlu0 %v153
    %v155 = vpop.xlane.xlu0 %154
    %v156 = vsel %vm140, %v152, 0.0
    %157 = vadd.xlane.f32.xlu0 %v156
    %v158 = vpop.xlane.xlu0 %157
    %v159 = vrcp.pop %v155
    %v160 = vmul.f32 1.1111112, %v159
    %v161 = vrcp.pop %v158
    %v162 = vmul.f32 1.1111112, %v161
    %v163 = vmul.f32 %v150, %v160
    %v164 = vmul.f32 %v152, %v162
    %v165 = vld [vmem:[#allocation3] sm:$0xff]
    %v166 = vld [vmem:[#allocation3 + $0x8] sm:$0xff]
    %vm167 = vcmp.ge.s32.totalorder %v165, 214748365
    %vm168 = vcmp.ge.s32.totalorder %v166, 214748365
    %v169 = vsel %vm167, %v163, 0.0
    %v170 = vsel %vm168, %v164, 0.0
    %v171 = vld [vmem:[%s3] sm:$0xff]
    %v172 = vld [vmem:[%s3 + $0x8] sm:$0xff]
    %v173 = vld [vmem:[%s3 + $0x10] sm:$0xff]
    %v174 = vld [vmem:[%s3 + $0x18] sm:$0xff]
    %v176 = vsel %vm140, %v169, 0
    %v179 = vsel %vm140, %v170, 0
    %181 = vmatprep.subr.mxu0 0.0
    %182 = vmatpush1.msra.mxu0 0.0
    %183 = vmatprep.subr.mxu0 0.0
    %184 = vmatpush1.msra.mxu0 0.0
    %185 = vmatprep.subr.mxu0 0.0
    %186 = vmatpush1.msra.mxu0 0.0
    %187 = vmatprep.subr.mxu0 0.0
    %188 = vmatpush1.msra.mxu0 0.0
    %189 = vmatprep.subr.mxu0 0.0
    %190 = vmatpush1.msra.mxu0 0.0
    %191 = vmatprep.subr.mxu0 0.0
    %192 = vmatpush1.msra.mxu0 0.0
    %193 = vmatprep.subr.mxu0 0.0
    %194 = vmatpush1.msra.mxu0 0.0
    %195 = vmatprep.subr.mxu0 0.0
    %196 = vmatpush1.msra.mxu0 0.0
    %197 = vmatprep.subr.mxu0 0.0
    %198 = vmatpush1.msra.mxu0 0.0
    %199 = vmatprep.subr.mxu0 0.0
    %200 = vmatpush1.msra.mxu0 0.0
    %201 = vmatprep.subr.mxu0 0.0
    %202 = vmatpush1.msra.mxu0 0.0
    %203 = vmatprep.subr.mxu0 0.0
    %204 = vmatpush1.msra.mxu0 0.0
    %205 = vmatprep.subr.mxu0 0.0
    %206 = vmatpush1.msra.mxu0 %v174
    %207 = vmatprep.subr.mxu0 0.0
    %208 = vmatpush1.msra.mxu0 %v173
    %209 = vmatprep.subr.mxu0 0.0
    %210 = vmatpush1.msra.mxu0 %v172
    %211 = vmatprep.subr.mxu0 0.0
    %212 = vmatpush1.msra.mxu0 %v171
    %213 = vmatprep.subr.mxu0 0.0
    %214 = vmatpush2.msra.mxu0 0.0
    %215 = vmatprep.subr.mxu0 0.0
    %216 = vmatpush2.msra.mxu0 0.0
    %217 = vmatprep.subr.mxu0 0.0
    %218 = vmatpush2.msra.mxu0 0.0
    %219 = vmatprep.subr.mxu0 0.0
    %220 = vmatpush2.msra.mxu0 0.0
    %221 = vmatprep.subr.mxu0 0.0
    %222 = vmatpush2.msra.mxu0 0.0
    %223 = vmatprep.subr.mxu0 0.0
    %224 = vmatpush2.msra.mxu0 0.0
    %225 = vmatprep.subr.mxu0 0.0
    %226 = vmatpush2.msra.mxu0 0.0
    %227 = vmatprep.subr.mxu0 0.0
    %228 = vmatpush2.msra.mxu0 0.0
    %229 = vmatprep.subr.mxu0 0.0
    %230 = vmatpush2.msra.mxu0 0.0
    %231 = vmatprep.subr.mxu0 0.0
    %232 = vmatpush2.msra.mxu0 0.0
    %233 = vmatprep.subr.mxu0 0.0
    %234 = vmatpush2.msra.mxu0 0.0
    %235 = vmatprep.subr.mxu0 0.0
    %236 = vmatpush2.msra.mxu0 0.0
    %237 = vmatprep.subr.mxu0 0.0
    %238 = vmatpush2.msra.mxu0 0.0
    %239 = vmatprep.subr.mxu0 0.0
    %240 = vmatpush2.msra.mxu0 0.0
    %241 = vmatprep.subr.mxu0 0.0
    %242 = vmatpush2.msra.mxu0 0.0
    %243 = vmatprep.subr.mxu0 0.0
    %244 = vmatpush2.msra.mxu0 0.0
    %245 = vmatprep.mubr.f32.mxu0 0.0
    %246 = vmatmul.mubr.f32.gmra.mxu0 %v176
    %v247 = vpop.f32.mrf.mxu0
    %v248 = vadd.f32 0.0, %v247
    %v249 = vpop.f32.mrf.mxu0
    %250 = vmatprep.mubr.f32.mxu0 0.0
    %251 = vmatmul.mubr.f32.gmra.mxu0 %v179
    %v252 = vpop.f32.mrf.mxu0
    %v253 = vadd.f32 0.0, %v252
    %v254 = vpop.f32.mrf.mxu0
    %255 = vdwg.mxu0
    %256 = vst [vmem:[#allocation6] sm:$0xff] %v248
    %257 = vst [vmem:[#allocation6 + $0x8] sm:$0xff] %v253
    // Predicated region
    $region26: #{tpu_custom_call.1} parent=1 // pred_check
      _
    $region27: #{tpu_custom_call.1} parent=1 // pred_check_branch
      %259 = sbr.rel (0) target = $region29
    $region28: #{tpu_custom_call.1} parent=1 // pred_region
      %s261 = ssub.s32 256, 256
      %262 = vsyncadd [#allocation5], %s261
      %s263 = sshll.u32 [#allocation6], 4
      %s264 = int_to_ptr.vmem [resolvable:$true] %s263
      %269 = dma.vmem_to_hbm [thread:$0]  %s264, 256, %s5, [#allocation5], 128, 128, 8
    $region29: #{tpu_custom_call.1} parent=1 // pred_fallthru
      _
    // Predicated region
    $region30: #{tpu_custom_call.1} parent=1 // pred_check
      _
    $region31: #{tpu_custom_call.1} parent=1 // pred_check_branch
      %271 = sbr.rel (0) target = $region33
    $region32: #{tpu_custom_call.1} parent=1 // pred_region
      %272 = dma.done [#allocation5], 256
    $region33: #{tpu_custom_call.1} parent=1 // pred_fallthru
      _
    %273 = vsyncpa [#allocation4], 1
    %274 = vsyncpa [#allocation5], 1

</llo_original>
